<compile_context>
chip_gen: v6e
topology: v6e:2x2x1
jax: 0.10.0
libtpu: 0.0.40
codegen_flags: <defaults>
</compile_context>

<pallas_src>
import jax
import jax.numpy as jnp
from jax import lax
from jax.experimental import pallas as pl
from jax.experimental.pallas import tpu as pltpu

NUM_EMB = 100       # num_embeddings
NUM_EMB_PAD = 128   # padded contraction dim (lane-aligned)
EMB_DIM = 32        # embedding_dim
SG_IN = 230         # space-group feature dim
SG_OUT = 16
H1 = 64
H2 = 32
OUT = 1


def materials_kernel(ids_ref, sg_ref,
                     embf_ref, wsgf_ref, bf_ref,
                     w2_ref, b2_ref,
                     w3_ref, b3_ref,
                     out_ref):
    # ids_ref: (TB, 1) int32; sg_ref: (TB, 230) f32
    ids = ids_ref[...]                                            # (TB, 1)
    TB = ids.shape[0]

    # Embedding lookup fused with fc1-left-half: one-hot (TB,128) @ (128,64).
    onehot = (ids == lax.broadcasted_iota(jnp.int32, (TB, NUM_EMB_PAD), 1)
              ).astype(jnp.float32)
    h1 = jnp.dot(onehot, embf_ref[...],
                 preferred_element_type=jnp.float32)              # (TB, 64)

    # Space-group projection fused with fc1-right-half: (TB,230) @ (230,64).
    h1 = h1 + jnp.dot(sg_ref[...], wsgf_ref[...],
                      preferred_element_type=jnp.float32)
    h1 = jnp.maximum(h1 + bf_ref[...], 0.0)                       # fused bias + ReLU

    # fc2 (64 -> 32) + relu
    h2 = jnp.maximum(
        jnp.dot(h1, w2_ref[...], preferred_element_type=jnp.float32)
        + b2_ref[...], 0.0)                                       # (TB, 32)

    # fc3 (32 -> 1)
    out_ref[...] = (jnp.dot(h2, w3_ref[...],
                            preferred_element_type=jnp.float32)
                    + b3_ref[...])                                # (TB, 1)


def _round_up(x, m):
    return ((x + m - 1) // m) * m


def materials_forward(composition, space_group, fused_params, *, tb=512):
    """composition: (B,) int32 in [0, 100); space_group: (B, 230) float."""
    (embf, wsgf, bf, w2, b2, w3, b3) = fused_params

    B = composition.shape[0]
    TB = min(tb, _round_up(B, 8))          # sublane-aligned tile, capped at tb
    Bp = _round_up(B, TB)                  # pad ragged tail to a full tile

    ids = composition.astype(jnp.int32).reshape(B, 1)
    ids = jnp.pad(ids, ((0, Bp - B), (0, 0)))                     # pad rows -> id 0
    sg = jnp.pad(space_group.astype(jnp.float32), ((0, Bp - B), (0, 0)))

    def batch_spec(cols):
        return pl.BlockSpec((TB, cols), lambda i: (i, 0))

    def weight_spec(shape):
        # constant index_map -> block stays VMEM-resident across grid steps
        return pl.BlockSpec(shape, lambda i: (0, 0))

    out = pl.pallas_call(
        materials_kernel,
        out_shape=jax.ShapeDtypeStruct((Bp, OUT), jnp.float32),
        grid=(Bp // TB,),
        in_specs=[
            batch_spec(1),                 # ids
            batch_spec(SG_IN),             # space_group (dominant HBM stream)
            weight_spec(embf.shape),       # (128, 64)  fused embedding table
            weight_spec(wsgf.shape),       # (230, 64)  fused sg projection
            weight_spec(bf.shape),         # (1, 64)    fused bias
            weight_spec(w2.shape),         # (64, 32)
            weight_spec(b2.shape),         # (1, 32)
            weight_spec(w3.shape),         # (32, 1)
            weight_spec(b3.shape),         # (1, 1)
        ],
        out_specs=pl.BlockSpec((TB, OUT), lambda i: (i, 0)),
        compiler_params=pltpu.CompilerParams(
            dimension_semantics=("parallel",)),    # megacore on v7x
    )(ids, sg, embf, wsgf, bf, w2, b2, w3, b3)
    return out[:B]


def init_params(key):
    """Raw PyTorch-layout parameters (weights stored as [in, out])."""
    ks = jax.random.split(key, 10)

    def lin(k, fan_in, shape):
        bound = 1.0 / jnp.sqrt(fan_in)
        return jax.random.uniform(k, shape, jnp.float32, -bound, bound)

    emb = jax.random.normal(ks[0], (NUM_EMB, EMB_DIM), jnp.float32)  # Embedding(100, 32)
    wsg = lin(ks[1], SG_IN, (SG_IN, SG_OUT))                         # Linear(230, 16).W^T
    bsg = lin(ks[2], SG_IN, (1, SG_OUT))
    w1 = lin(ks[3], EMB_DIM + SG_OUT, (EMB_DIM + SG_OUT, H1))        # Linear(48, 64).W^T
    b1 = lin(ks[4], EMB_DIM + SG_OUT, (1, H1))
    w2 = lin(ks[5], H1, (H1, H2))                                    # Linear(64, 32).W^T
    b2 = lin(ks[6], H1, (1, H2))
    w3 = lin(ks[7], H2, (H2, OUT))                                   # Linear(32, 1).W^T
    b3 = lin(ks[8], H2, (1, OUT))
    return dict(emb=emb, wsg=wsg, bsg=bsg, w1=w1, b1=b1,
                w2=w2, b2=b2, w3=w3, b3=b3)


def fuse_params(p):
    """Host-side (param-load-time) algebraic fusion of the pre-ReLU linears."""
    w1a, w1b = p["w1"][:EMB_DIM], p["w1"][EMB_DIM:]
    emb_fused = p["emb"] @ w1a                                   # (100, 64)
    emb_fused = jnp.pad(emb_fused,
                        ((0, NUM_EMB_PAD - NUM_EMB), (0, 0)))    # (128, 64)
    wsg_fused = p["wsg"] @ w1b                                   # (230, 64)
    b_fused = p["bsg"] @ w1b + p["b1"]                           # (1, 64)
    return (emb_fused, wsg_fused, b_fused,
            p["w2"], p["b2"], p["w3"], p["b3"])


def reference_forward(composition, space_group, p):
    """Pure-JAX reference mirroring the PyTorch forward exactly (unfused)."""
    comp_embed = jnp.take(p["emb"], composition, axis=0)         # nn.Embedding
    sg_embed = space_group @ p["wsg"] + p["bsg"][0]              # Linear(230, 16)
    x = jnp.concatenate([comp_embed, sg_embed], axis=1)          # cat dim=1
    x = jnp.maximum(x @ p["w1"] + p["b1"][0], 0.0)
    x = jnp.maximum(x @ p["w2"] + p["b2"][0], 0.0)
    return x @ p["w3"] + p["b3"][0]


if __name__ == "__main__":
    key = jax.random.PRNGKey(0)
    kp, kc, ks, kc2, ks2 = jax.random.split(key, 5)

    params = init_params(kp)
    fused = fuse_params(params)

    # Small demo batch (single grid step).
    B = 8
    composition = jax.random.randint(kc, (B,), 0, NUM_EMB, dtype=jnp.int32)
    space_group = jax.random.normal(ks, (B, SG_IN), jnp.float32)

    out = materials_forward(composition, space_group, fused)
    out = jax.block_until_ready(out)
    ref = reference_forward(composition, space_group, params)
    assert out.shape == (B, 1), out.shape
    assert jnp.allclose(out, ref, atol=1e-4, rtol=1e-4)

    # Larger ragged batch to exercise batch tiling + tail padding (grid > 1).
    B2 = 300
    comp2 = jax.random.randint(kc2, (B2,), 0, NUM_EMB, dtype=jnp.int32)
    sg2 = jax.random.normal(ks2, (B2, SG_IN), jnp.float32)
    out2 = materials_forward(comp2, sg2, fused, tb=128)
    out2 = jax.block_until_ready(out2)
    ref2 = reference_forward(comp2, sg2, params)
    assert out2.shape == (B2, 1), out2.shape
    assert jnp.allclose(out2, ref2, atol=1e-4, rtol=1e-4)

    print("KERNEL_OK")
</pallas_src>

<mosaic_0001>
module attributes {stable_mosaic.version = 11 : i64} {
  func.func @materials_kernel(%arg0: i32, %arg1: memref<8x1xi32, #tpu.memory_space<vmem>>, %arg2: memref<8x230xf32, #tpu.memory_space<vmem>>, %arg3: memref<128x64xf32, #tpu.memory_space<vmem>>, %arg4: memref<230x64xf32, #tpu.memory_space<vmem>>, %arg5: memref<1x64xf32, #tpu.memory_space<vmem>>, %arg6: memref<64x32xf32, #tpu.memory_space<vmem>>, %arg7: memref<1x32xf32, #tpu.memory_space<vmem>>, %arg8: memref<32x1xf32, #tpu.memory_space<vmem>>, %arg9: memref<1x1xf32, #tpu.memory_space<vmem>>, %arg10: memref<8x1xf32, #tpu.memory_space<vmem>>) attributes {dimension_semantics = [#tpu.dimension_semantics<parallel>], iteration_bounds = array<i64: 1>, scalar_prefetch = 0 : i64, scratch_operands = 0 : i64, tpu.core_type = #tpu.core_type<tc>, window_params = [{transform_indices = @transform_0, window_bounds = array<i64: 8, 1>}, {transform_indices = @transform_1, window_bounds = array<i64: 8, 230>}, {pipeline_mode = #tpu.pipeline_mode<synchronous>, transform_indices = @transform_2, window_bounds = array<i64: 128, 64>}, {pipeline_mode = #tpu.pipeline_mode<synchronous>, transform_indices = @transform_3, window_bounds = array<i64: 230, 64>}, {pipeline_mode = #tpu.pipeline_mode<synchronous>, transform_indices = @transform_4, window_bounds = array<i64: 1, 64>}, {pipeline_mode = #tpu.pipeline_mode<synchronous>, transform_indices = @transform_5, window_bounds = array<i64: 64, 32>}, {pipeline_mode = #tpu.pipeline_mode<synchronous>, transform_indices = @transform_6, window_bounds = array<i64: 1, 32>}, {pipeline_mode = #tpu.pipeline_mode<synchronous>, transform_indices = @transform_7, window_bounds = array<i64: 32, 1>}, {pipeline_mode = #tpu.pipeline_mode<synchronous>, transform_indices = @transform_8, window_bounds = array<i64: 1, 1>}, {transform_indices = @transform_9, window_bounds = array<i64: 8, 1>}]} {
    %c0 = arith.constant 0 : index
    %c0_0 = arith.constant 0 : index
    %0 = vector.load %arg1[%c0, %c0_0] : memref<8x1xi32, #tpu.memory_space<vmem>>, vector<8x1xi32>
    %1 = tpu.iota {dimensions = array<i32: 1>} : vector<8x128xi32>
    %2 = vector.broadcast %0 : vector<8x1xi32> to vector<8x128xi32>
    %3 = arith.cmpi eq, %2, %1 : vector<8x128xi32>
    %4 = arith.extui %3 : vector<8x128xi1> to vector<8x128xi32>
    %5 = arith.sitofp %4 : vector<8x128xi32> to vector<8x128xf32>
    %c0_1 = arith.constant 0 : index
    %c0_2 = arith.constant 0 : index
    %6 = vector.load %arg3[%c0_1, %c0_2] : memref<128x64xf32, #tpu.memory_space<vmem>>, vector<128x64xf32>
    %cst = arith.constant dense<0.000000e+00> : vector<8x64xf32>
    %7 = tpu.matmul %5, %6, %cst {dimension_numbers = #tpu.dot_dimension_numbers<[1], [0], [0], [1], [0, 0, 1, 1], [], []>} : vector<8x128xf32>, vector<128x64xf32>, vector<8x64xf32> -> vector<8x64xf32>
    %c0_3 = arith.constant 0 : index
    %c0_4 = arith.constant 0 : index
    %8 = vector.load %arg2[%c0_3, %c0_4] : memref<8x230xf32, #tpu.memory_space<vmem>>, vector<8x230xf32>
    %c0_5 = arith.constant 0 : index
    %c0_6 = arith.constant 0 : index
    %9 = vector.load %arg4[%c0_5, %c0_6] : memref<230x64xf32, #tpu.memory_space<vmem>>, vector<230x64xf32>
    %cst_7 = arith.constant dense<0.000000e+00> : vector<8x64xf32>
    %10 = tpu.matmul %8, %9, %cst_7 {dimension_numbers = #tpu.dot_dimension_numbers<[1], [0], [0], [1], [0, 0, 1, 1], [], []>} : vector<8x230xf32>, vector<230x64xf32>, vector<8x64xf32> -> vector<8x64xf32>
    %11 = arith.addf %7, %10 : vector<8x64xf32>
    %c0_8 = arith.constant 0 : index
    %c0_9 = arith.constant 0 : index
    %12 = vector.load %arg5[%c0_8, %c0_9] : memref<1x64xf32, #tpu.memory_space<vmem>>, vector<1x64xf32>
    %13 = vector.broadcast %12 : vector<1x64xf32> to vector<8x64xf32>
    %14 = arith.addf %11, %13 : vector<8x64xf32>
    %cst_10 = arith.constant 0.000000e+00 : f32
    %15 = vector.broadcast %cst_10 : f32 to vector<8x64xf32>
    %16 = arith.maximumf %14, %15 : vector<8x64xf32>
    %c0_11 = arith.constant 0 : index
    %c0_12 = arith.constant 0 : index
    %17 = vector.load %arg6[%c0_11, %c0_12] : memref<64x32xf32, #tpu.memory_space<vmem>>, vector<64x32xf32>
    %cst_13 = arith.constant dense<0.000000e+00> : vector<8x32xf32>
    %18 = tpu.matmul %16, %17, %cst_13 {dimension_numbers = #tpu.dot_dimension_numbers<[1], [0], [0], [1], [0, 0, 1, 1], [], []>} : vector<8x64xf32>, vector<64x32xf32>, vector<8x32xf32> -> vector<8x32xf32>
    %c0_14 = arith.constant 0 : index
    %c0_15 = arith.constant 0 : index
    %19 = vector.load %arg7[%c0_14, %c0_15] : memref<1x32xf32, #tpu.memory_space<vmem>>, vector<1x32xf32>
    %20 = vector.broadcast %19 : vector<1x32xf32> to vector<8x32xf32>
    %21 = arith.addf %18, %20 : vector<8x32xf32>
    %cst_16 = arith.constant 0.000000e+00 : f32
    %22 = vector.broadcast %cst_16 : f32 to vector<8x32xf32>
    %23 = arith.maximumf %21, %22 : vector<8x32xf32>
    %c0_17 = arith.constant 0 : index
    %c0_18 = arith.constant 0 : index
    %24 = vector.load %arg8[%c0_17, %c0_18] : memref<32x1xf32, #tpu.memory_space<vmem>>, vector<32x1xf32>
    %cst_19 = arith.constant dense<0.000000e+00> : vector<8x1xf32>
    %25 = tpu.matmul %23, %24, %cst_19 {dimension_numbers = #tpu.dot_dimension_numbers<[1], [0], [0], [1], [0, 0, 1, 1], [], []>} : vector<8x32xf32>, vector<32x1xf32>, vector<8x1xf32> -> vector<8x1xf32>
    %c0_20 = arith.constant 0 : index
    %c0_21 = arith.constant 0 : index
    %26 = vector.load %arg9[%c0_20, %c0_21] : memref<1x1xf32, #tpu.memory_space<vmem>>, vector<1x1xf32>
    %27 = vector.broadcast %26 : vector<1x1xf32> to vector<8x1xf32>
    %28 = arith.addf %25, %27 : vector<8x1xf32>
    %c0_22 = arith.constant 0 : index
    %c0_23 = arith.constant 0 : index
    %29 = vector.load %arg10[%c0_22, %c0_23] : memref<8x1xf32, #tpu.memory_space<vmem>>, vector<8x1xf32>
    tpu.vector_store %arg10[%c0_22, %c0_23], %28 {strides = array<i32>} : memref<8x1xf32, #tpu.memory_space<vmem>>, vector<8x1xf32>,
    return
  }
  func.func @transform_0(%arg0: i32) -> (i32, i32) {
    %c0_i32 = arith.constant 0 : i32
    %c0_i32_0 = arith.constant 0 : i32
    return %arg0, %c0_i32 : i32, i32
  }
  func.func @transform_1(%arg0: i32) -> (i32, i32) {
    %c0_i32 = arith.constant 0 : i32
    %c0_i32_0 = arith.constant 0 : i32
    return %arg0, %c0_i32 : i32, i32
  }
  func.func @transform_2(%arg0: i32) -> (i32, i32) {
    %c0_i32 = arith.constant 0 : i32
    %c0_i32_0 = arith.constant 0 : i32
    %c0_i32_1 = arith.constant 0 : i32
    return %c0_i32, %c0_i32_0 : i32, i32
  }
  func.func @transform_3(%arg0: i32) -> (i32, i32) {
    %c0_i32 = arith.constant 0 : i32
    %c0_i32_0 = arith.constant 0 : i32
    %c0_i32_1 = arith.constant 0 : i32
    return %c0_i32, %c0_i32_0 : i32, i32
  }
  func.func @transform_4(%arg0: i32) -> (i32, i32) {
    %c0_i32 = arith.constant 0 : i32
    %c0_i32_0 = arith.constant 0 : i32
    %c0_i32_1 = arith.constant 0 : i32
    return %c0_i32, %c0_i32_0 : i32, i32
  }
  func.func @transform_5(%arg0: i32) -> (i32, i32) {
    %c0_i32 = arith.constant 0 : i32
    %c0_i32_0 = arith.constant 0 : i32
    %c0_i32_1 = arith.constant 0 : i32
    return %c0_i32, %c0_i32_0 : i32, i32
  }
  func.func @transform_6(%arg0: i32) -> (i32, i32) {
    %c0_i32 = arith.constant 0 : i32
    %c0_i32_0 = arith.constant 0 : i32
    %c0_i32_1 = arith.constant 0 : i32
    return %c0_i32, %c0_i32_0 : i32, i32
  }
  func.func @transform_7(%arg0: i32) -> (i32, i32) {
    %c0_i32 = arith.constant 0 : i32
    %c0_i32_0 = arith.constant 0 : i32
    %c0_i32_1 = arith.constant 0 : i32
    return %c0_i32, %c0_i32_0 : i32, i32
  }
  func.func @transform_8(%arg0: i32) -> (i32, i32) {
    %c0_i32 = arith.constant 0 : i32
    %c0_i32_0 = arith.constant 0 : i32
    %c0_i32_1 = arith.constant 0 : i32
    return %c0_i32, %c0_i32_0 : i32, i32
  }
  func.func @transform_9(%arg0: i32) -> (i32, i32) {
    %c0_i32 = arith.constant 0 : i32
    %c0_i32_0 = arith.constant 0 : i32
    return %arg0, %c0_i32 : i32, i32
  }
}

</mosaic_0001>

<llo_original>
// kernel: tpu_custom_call.1
$region0: #{tpu_custom_call.1}
  #allocation0 [shape = 'u32[]', space=smem, size = 0x4, offset = 0x4, fixed_abs, tag = 'smem constant byte address 0x4 - core index']
  #allocation1 [shape = 'u32[144,128]{1,0:T(1,128)}', space=vmem, size = 0x12000, scoped, tag = 'internal scratch']
  #allocation2 [shape = 'f32[1,1]{1,0:T(1,128)S(1)}', space=vmem, size = 0x200, scoped, tag = 'scoped memory for tpu_custom_call.1']
  %s0 = inlined_call_operand.vmem [shape: s32[8,1], index: 0, kind: input, shape index: {}]
  %s1 = inlined_call_operand.vmem [shape: f32[8,230], index: 1, kind: input, shape index: {}]
  %s2 = inlined_call_operand.vmem [shape: f32[128,64], index: 2, kind: input, shape index: {}]
  %s3 = inlined_call_operand.vmem [shape: f32[230,64], index: 3, kind: input, shape index: {}]
  %s4 = inlined_call_operand.vmem [shape: f32[1,64], index: 4, kind: input, shape index: {}]
  %s5 = inlined_call_operand.vmem [shape: f32[64,32], index: 5, kind: input, shape index: {}]
  %s6 = inlined_call_operand.vmem [shape: f32[1,32], index: 6, kind: input, shape index: {}]
  %s7 = inlined_call_operand.vmem [shape: f32[32,1], index: 7, kind: input, shape index: {}]
  %s8 = inlined_call_operand.<no memory space> [shape: f32[1,1], index: 8, kind: input, shape index: {}]
  %s9 = inlined_call_operand.vmem [shape: f32[8,1], index: 9, kind: output, shape index: {}]
  %s10 = sld [smem:[#allocation0]]
  $region46: #{tpu_custom_call.1} parent=0
    _
  %s12 = ssub.s32 1, %s10
  %s13 = scalar_select 0, %s12, %s10
  %v14 = vstv %s8
  %15 = vst [vmem:[#allocation2] sm:$0x1] %v14
  // Predicated region
  $region2: #{tpu_custom_call.1} parent=0 // pred_check
    _
  $region3: #{tpu_custom_call.1} parent=0 // pred_check_branch
    %17 = sbr.rel (0) target = $region5
  $region4: #{tpu_custom_call.1} parent=0 // pred_region
    _
  $region5: #{tpu_custom_call.1} parent=0 // pred_fallthru
    _
  // Predicated region
  $region6: #{tpu_custom_call.1} parent=0 // pred_check
    _
  $region7: #{tpu_custom_call.1} parent=0 // pred_check_branch
    %19 = sbr.rel (0) target = $region9
  $region8: #{tpu_custom_call.1} parent=0 // pred_region
    _
  $region9: #{tpu_custom_call.1} parent=0 // pred_fallthru
    _
  // Predicated region
  $region10: #{tpu_custom_call.1} parent=0 // pred_check
    _
  $region11: #{tpu_custom_call.1} parent=0 // pred_check_branch
    %21 = sbr.rel (0) target = $region13
  $region12: #{tpu_custom_call.1} parent=0 // pred_region
    _
  $region13: #{tpu_custom_call.1} parent=0 // pred_fallthru
    _
  // Predicated region
  $region14: #{tpu_custom_call.1} parent=0 // pred_check
    _
  $region15: #{tpu_custom_call.1} parent=0 // pred_check_branch
    %23 = sbr.rel (0) target = $region17
  $region16: #{tpu_custom_call.1} parent=0 // pred_region
    _
  $region17: #{tpu_custom_call.1} parent=0 // pred_fallthru
    _
  // Predicated region
  $region18: #{tpu_custom_call.1} parent=0 // pred_check
    _
  $region19: #{tpu_custom_call.1} parent=0 // pred_check_branch
    %25 = sbr.rel (0) target = $region21
  $region20: #{tpu_custom_call.1} parent=0 // pred_region
    _
  $region21: #{tpu_custom_call.1} parent=0 // pred_fallthru
    _
  // Predicated region
  $region22: #{tpu_custom_call.1} parent=0 // pred_check
    _
  $region23: #{tpu_custom_call.1} parent=0 // pred_check_branch
    %27 = sbr.rel (0) target = $region25
  $region24: #{tpu_custom_call.1} parent=0 // pred_region
    _
  $region25: #{tpu_custom_call.1} parent=0 // pred_fallthru
    _
  // Predicated region
  $region26: #{tpu_custom_call.1} parent=0 // pred_check
    _
  $region27: #{tpu_custom_call.1} parent=0 // pred_check_branch
    %29 = sbr.rel (0) target = $region29
  $region28: #{tpu_custom_call.1} parent=0 // pred_region
    _
  $region29: #{tpu_custom_call.1} parent=0 // pred_fallthru
    _
  // Predicated region
  $region30: #{tpu_custom_call.1} parent=0 // pred_check
    _
  $region31: #{tpu_custom_call.1} parent=0 // pred_check_branch
    %31 = sbr.rel (0) target = $region33
  $region32: #{tpu_custom_call.1} parent=0 // pred_region
    _
  $region33: #{tpu_custom_call.1} parent=0 // pred_fallthru
    _
  // Predicated region
  $region34: #{tpu_custom_call.1} parent=0 // pred_check
    _
  $region35: #{tpu_custom_call.1} parent=0 // pred_check_branch
    %33 = sbr.rel (0) target = $region37
  $region36: #{tpu_custom_call.1} parent=0 // pred_region
    _
  $region37: #{tpu_custom_call.1} parent=0 // pred_fallthru
    _
  %v34 = vld [vmem:[%s0] sm:$0xff]
  %v35 = vlaneseq
  %v36 = vand.u32 %v35, 127
  %37 = vset.pattern.permute.xlu0 0
  %38 = vperm.xlu0 %37, %v34
  %v39 = vpop.permute.xlu0 %38
  %vm40 = vcmp.eq.s32.totalorder %v39, %v36
  %v41 = vsel %vm40, 1, 0
  %v42 = vcvt.s32.f32 %v41
  %v43 = vld [vmem:[%s2] sm:$0xff]
  %v44 = vld [vmem:[%s2 + $0x8] sm:$0xff]
  %v45 = vld [vmem:[%s2 + $0x10] sm:$0xff]
  %v46 = vld [vmem:[%s2 + $0x18] sm:$0xff]
  %v47 = vld [vmem:[%s2 + $0x20] sm:$0xff]
  %v48 = vld [vmem:[%s2 + $0x28] sm:$0xff]
  %v49 = vld [vmem:[%s2 + $0x30] sm:$0xff]
  %v50 = vld [vmem:[%s2 + $0x38] sm:$0xff]
  %v51 = vld [vmem:[%s2 + $0x40] sm:$0xff]
  %v52 = vld [vmem:[%s2 + $0x48] sm:$0xff]
  %v53 = vld [vmem:[%s2 + $0x50] sm:$0xff]
  %v54 = vld [vmem:[%s2 + $0x58] sm:$0xff]
  %v55 = vld [vmem:[%s2 + $0x60] sm:$0xff]
  %v56 = vld [vmem:[%s2 + $0x68] sm:$0xff]
  %v57 = vld [vmem:[%s2 + $0x70] sm:$0xff]
  %v58 = vld [vmem:[%s2 + $0x78] sm:$0xff]
  %v59 = vld [vmem:[%s1] sm:$0xff]
  %v60 = vld [vmem:[%s1 + $0x8] sm:$0xff]
  %v61 = vld [vmem:[%s3] sm:$0xff]
  %v62 = vld [vmem:[%s3 + $0x8] sm:$0xff]
  %v63 = vld [vmem:[%s3 + $0x10] sm:$0xff]
  %v64 = vld [vmem:[%s3 + $0x18] sm:$0xff]
  %v65 = vld [vmem:[%s3 + $0x20] sm:$0xff]
  %v66 = vld [vmem:[%s3 + $0x28] sm:$0xff]
  %v67 = vld [vmem:[%s3 + $0x30] sm:$0xff]
  %v68 = vld [vmem:[%s3 + $0x38] sm:$0xff]
  %v69 = vld [vmem:[%s3 + $0x40] sm:$0xff]
  %v70 = vld [vmem:[%s3 + $0x48] sm:$0xff]
  %v71 = vld [vmem:[%s3 + $0x50] sm:$0xff]
  %v72 = vld [vmem:[%s3 + $0x58] sm:$0xff]
  %v73 = vld [vmem:[%s3 + $0x60] sm:$0xff]
  %v74 = vld [vmem:[%s3 + $0x68] sm:$0xff]
  %v75 = vld [vmem:[%s3 + $0x70] sm:$0xff]
  %v76 = vld [vmem:[%s3 + $0x78] sm:$0xff]
  %v77 = vld [vmem:[%s3 + $0x80] sm:$0xff]
  %v78 = vld [vmem:[%s3 + $0x88] sm:$0xff]
  %v79 = vld [vmem:[%s3 + $0x90] sm:$0xff]
  %v80 = vld [vmem:[%s3 + $0x98] sm:$0xff]
  %v81 = vld [vmem:[%s3 + $0xa0] sm:$0xff]
  %v82 = vld [vmem:[%s3 + $0xa8] sm:$0xff]
  %v83 = vld [vmem:[%s3 + $0xb0] sm:$0xff]
  %v84 = vld [vmem:[%s3 + $0xb8] sm:$0xff]
  %v85 = vld [vmem:[%s3 + $0xc0] sm:$0xff]
  %v86 = vld [vmem:[%s3 + $0xc8] sm:$0xff]
  %v87 = vld [vmem:[%s3 + $0xd0] sm:$0xff]
  %v88 = vld [vmem:[%s3 + $0xd8] sm:$0xff]
  %v89 = vld [vmem:[%s3 + $0xe0] sm:$0x3f]
  %vm90 = vcmask 834560
  %v92 = vsel %vm90, %v60, 0
  %vm94 = vcmask 1045504
  %v96 = vsel %vm94, %v89, 0
  %98 = vmatprep.subr.mxu0 0.0
  %99 = vmatpush1.msra.mxu0 %v76
  %100 = vmatprep.subr.mxu0 0.0
  %101 = vmatpush1.msra.mxu0 %v75
  %102 = vmatprep.subr.mxu0 0.0
  %103 = vmatpush1.msra.mxu0 %v74
  %104 = vmatprep.subr.mxu0 0.0
  %105 = vmatpush1.msra.mxu0 %v73
  %106 = vmatprep.subr.mxu0 0.0
  %107 = vmatpush1.msra.mxu0 %v72
  %108 = vmatprep.subr.mxu0 0.0
  %109 = vmatpush1.msra.mxu0 %v71
  %110 = vmatprep.subr.mxu0 0.0
  %111 = vmatpush1.msra.mxu0 %v70
  %112 = vmatprep.subr.mxu0 0.0
  %113 = vmatpush1.msra.mxu0 %v69
  %114 = vmatprep.subr.mxu0 0.0
  %115 = vmatpush1.msra.mxu0 %v68
  %116 = vmatprep.subr.mxu0 0.0
  %117 = vmatpush1.msra.mxu0 %v67
  %118 = vmatprep.subr.mxu0 0.0
  %119 = vmatpush1.msra.mxu0 %v66
  %120 = vmatprep.subr.mxu0 0.0
  %121 = vmatpush1.msra.mxu0 %v65
  %122 = vmatprep.subr.mxu0 0.0
  %123 = vmatpush1.msra.mxu0 %v64
  %124 = vmatprep.subr.mxu0 0.0
  %125 = vmatpush1.msra.mxu0 %v63
  %126 = vmatprep.subr.mxu0 0.0
  %127 = vmatpush1.msra.mxu0 %v62
  %128 = vmatprep.subr.mxu0 0.0
  %129 = vmatpush1.msra.mxu0 %v61
  %130 = vmatprep.subr.mxu0 0.0
  %131 = vmatpush2.msra.mxu0 0.0
  %132 = vmatprep.subr.mxu0 0.0
  %133 = vmatpush2.msra.mxu0 0.0
  %134 = vmatprep.subr.mxu0 0.0
  %135 = vmatpush2.msra.mxu0 0.0
  %136 = vmatprep.subr.mxu0 0.0
  %137 = vmatpush2.msra.mxu0 %v96
  %138 = vmatprep.subr.mxu0 0.0
  %139 = vmatpush2.msra.mxu0 %v88
  %140 = vmatprep.subr.mxu0 0.0
  %141 = vmatpush2.msra.mxu0 %v87
  %142 = vmatprep.subr.mxu0 0.0
  %143 = vmatpush2.msra.mxu0 %v86
  %144 = vmatprep.subr.mxu0 0.0
  %145 = vmatpush2.msra.mxu0 %v85
  %146 = vmatprep.subr.mxu0 0.0
  %147 = vmatpush2.msra.mxu0 %v84
  %148 = vmatprep.subr.mxu0 0.0
  %149 = vmatpush2.msra.mxu0 %v83
  %150 = vmatprep.subr.mxu0 0.0
  %151 = vmatpush2.msra.mxu0 %v82
  %152 = vmatprep.subr.mxu0 0.0
  %153 = vmatpush2.msra.mxu0 %v81
  %154 = vmatprep.subr.mxu0 0.0
  %155 = vmatpush2.msra.mxu0 %v80
  %156 = vmatprep.subr.mxu0 0.0
  %157 = vmatpush2.msra.mxu0 %v79
  %158 = vmatprep.subr.mxu0 0.0
  %159 = vmatpush2.msra.mxu0 %v78
  %160 = vmatprep.subr.mxu0 0.0
  %161 = vmatpush2.msra.mxu0 %v77
  %162 = vmatprep.mubr.f32.mxu0 %v92
  %163 = vmatmul.mubr.f32.gmra.mxu0 %v59
  %v164 = vpop.f32.mrf.mxu0
  %v165 = vadd.f32 0.0, %v164
  %v166 = vpop.f32.mrf.mxu0
  %167 = vdwg.mxu0
  %168 = vmatprep.subr.mxu0 0.0
  %169 = vmatpush1.msra.mxu0 %v58
  %170 = vmatprep.subr.mxu0 0.0
  %171 = vmatpush1.msra.mxu0 %v57
  %172 = vmatprep.subr.mxu0 0.0
  %173 = vmatpush1.msra.mxu0 %v56
  %174 = vmatprep.subr.mxu0 0.0
  %175 = vmatpush1.msra.mxu0 %v55
  %176 = vmatprep.subr.mxu0 0.0
  %177 = vmatpush1.msra.mxu0 %v54
  %178 = vmatprep.subr.mxu0 0.0
  %179 = vmatpush1.msra.mxu0 %v53
  %180 = vmatprep.subr.mxu0 0.0
  %181 = vmatpush1.msra.mxu0 %v52
  %182 = vmatprep.subr.mxu0 0.0
  %183 = vmatpush1.msra.mxu0 %v51
  %184 = vmatprep.subr.mxu0 0.0
  %185 = vmatpush1.msra.mxu0 %v50
  %186 = vmatprep.subr.mxu0 0.0
  %187 = vmatpush1.msra.mxu0 %v49
  %188 = vmatprep.subr.mxu0 0.0
  %189 = vmatpush1.msra.mxu0 %v48
  %190 = vmatprep.subr.mxu0 0.0
  %191 = vmatpush1.msra.mxu0 %v47
  %192 = vmatprep.subr.mxu0 0.0
  %193 = vmatpush1.msra.mxu0 %v46
  %194 = vmatprep.subr.mxu0 0.0
  %195 = vmatpush1.msra.mxu0 %v45
  %196 = vmatprep.subr.mxu0 0.0
  %197 = vmatpush1.msra.mxu0 %v44
  %198 = vmatprep.subr.mxu0 0.0
  %199 = vmatpush1.msra.mxu0 %v43
  %200 = vmatprep.subr.mxu0 0.0
  %201 = vmatpush2.msra.mxu0 0.0
  %202 = vmatprep.subr.mxu0 0.0
  %203 = vmatpush2.msra.mxu0 0.0
  %204 = vmatprep.subr.mxu0 0.0
  %205 = vmatpush2.msra.mxu0 0.0
  %206 = vmatprep.subr.mxu0 0.0
  %207 = vmatpush2.msra.mxu0 0.0
  %208 = vmatprep.subr.mxu0 0.0
  %209 = vmatpush2.msra.mxu0 0.0
  %210 = vmatprep.subr.mxu0 0.0
  %211 = vmatpush2.msra.mxu0 0.0
  %212 = vmatprep.subr.mxu0 0.0
  %213 = vmatpush2.msra.mxu0 0.0
  %214 = vmatprep.subr.mxu0 0.0
  %215 = vmatpush2.msra.mxu0 0.0
  %216 = vmatprep.subr.mxu0 0.0
  %217 = vmatpush2.msra.mxu0 0.0
  %218 = vmatprep.subr.mxu0 0.0
  %219 = vmatpush2.msra.mxu0 0.0
  %220 = vmatprep.subr.mxu0 0.0
  %221 = vmatpush2.msra.mxu0 0.0
  %222 = vmatprep.subr.mxu0 0.0
  %223 = vmatpush2.msra.mxu0 0.0
  %224 = vmatprep.subr.mxu0 0.0
  %225 = vmatpush2.msra.mxu0 0.0
  %226 = vmatprep.subr.mxu0 0.0
  %227 = vmatpush2.msra.mxu0 0.0
  %228 = vmatprep.subr.mxu0 0.0
  %229 = vmatpush2.msra.mxu0 0.0
  %230 = vmatprep.subr.mxu0 0.0
  %231 = vmatpush2.msra.mxu0 0.0
  %232 = vmatprep.mubr.f32.mxu0 0.0
  %233 = vmatmul.mubr.f32.gmra.mxu0 %v42
  %v234 = vpop.f32.mrf.mxu0
  %v235 = vadd.f32 %v165, %v234
  %v236 = vpop.f32.mrf.mxu0
  %237 = vdwg.mxu0
  %v238 = vld [vmem:[%s4] sm:$0x1]
  %v240 = vlaneseq
  %v241 = vshrl.u32 %v240, 7
  %v242 = vsub.s32 0, %v241
  %v243 = vrot.slane %v238, %v242
  %v245 = vadd.f32 %v235, %v243
  %v246 = vmax.f32 %v245, 0.0
  %v247 = vld [vmem:[%s5] sm:$0xff]
  %v248 = vld [vmem:[%s5 + $0x8] sm:$0xff]
  %v249 = vld [vmem:[%s5 + $0x10] sm:$0xff]
  %v250 = vld [vmem:[%s5 + $0x18] sm:$0xff]
  %v251 = vld [vmem:[%s5 + $0x20] sm:$0xff]
  %v252 = vld [vmem:[%s5 + $0x28] sm:$0xff]
  %v253 = vld [vmem:[%s5 + $0x30] sm:$0xff]
  %v254 = vld [vmem:[%s5 + $0x38] sm:$0xff]
  %v255 = vld [vmem:[%s6] sm:$0x1]
  %v257 = vlaneseq
  %v258 = vshrl.u32 %v257, 7
  %v259 = vsub.s32 0, %v258
  %v260 = vrot.slane %v255, %v259
  %vm262 = vcmask 523264
  %v264 = vsel %vm262, %v246, 0
  %266 = vmatprep.subr.mxu0 0.0
  %267 = vmatpush1.msra.mxu0 0.0
  %268 = vmatprep.subr.mxu0 0.0
  %269 = vmatpush1.msra.mxu0 0.0
  %270 = vmatprep.subr.mxu0 0.0
  %271 = vmatpush1.msra.mxu0 0.0
  %272 = vmatprep.subr.mxu0 0.0
  %273 = vmatpush1.msra.mxu0 0.0
  %274 = vmatprep.subr.mxu0 0.0
  %275 = vmatpush1.msra.mxu0 0.0
  %276 = vmatprep.subr.mxu0 0.0
  %277 = vmatpush1.msra.mxu0 0.0
  %278 = vmatprep.subr.mxu0 0.0
  %279 = vmatpush1.msra.mxu0 0.0
  %280 = vmatprep.subr.mxu0 0.0
  %281 = vmatpush1.msra.mxu0 0.0
  %282 = vmatprep.subr.mxu0 0.0
  %283 = vmatpush1.msra.mxu0 %v254
  %284 = vmatprep.subr.mxu0 0.0
  %285 = vmatpush1.msra.mxu0 %v253
  %286 = vmatprep.subr.mxu0 0.0
  %287 = vmatpush1.msra.mxu0 %v252
  %288 = vmatprep.subr.mxu0 0.0
  %289 = vmatpush1.msra.mxu0 %v251
  %290 = vmatprep.subr.mxu0 0.0
  %291 = vmatpush1.msra.mxu0 %v250
  %292 = vmatprep.subr.mxu0 0.0
  %293 = vmatpush1.msra.mxu0 %v249
  %294 = vmatprep.subr.mxu0 0.0
  %295 = vmatpush1.msra.mxu0 %v248
  %296 = vmatprep.subr.mxu0 0.0
  %297 = vmatpush1.msra.mxu0 %v247
  %298 = vmatprep.subr.mxu0 0.0
  %299 = vmatpush2.msra.mxu0 0.0
  %300 = vmatprep.subr.mxu0 0.0
  %301 = vmatpush2.msra.mxu0 0.0
  %302 = vmatprep.subr.mxu0 0.0
  %303 = vmatpush2.msra.mxu0 0.0
  %304 = vmatprep.subr.mxu0 0.0
  %305 = vmatpush2.msra.mxu0 0.0
  %306 = vmatprep.subr.mxu0 0.0
  %307 = vmatpush2.msra.mxu0 0.0
  %308 = vmatprep.subr.mxu0 0.0
  %309 = vmatpush2.msra.mxu0 0.0
  %310 = vmatprep.subr.mxu0 0.0
  %311 = vmatpush2.msra.mxu0 0.0
  %312 = vmatprep.subr.mxu0 0.0
  %313 = vmatpush2.msra.mxu0 0.0
  %314 = vmatprep.subr.mxu0 0.0
  %315 = vmatpush2.msra.mxu0 0.0
  %316 = vmatprep.subr.mxu0 0.0
  %317 = vmatpush2.msra.mxu0 0.0
  %318 = vmatprep.subr.mxu0 0.0
  %319 = vmatpush2.msra.mxu0 0.0
  %320 = vmatprep.subr.mxu0 0.0
  %321 = vmatpush2.msra.mxu0 0.0
  %322 = vmatprep.subr.mxu0 0.0
  %323 = vmatpush2.msra.mxu0 0.0
  %324 = vmatprep.subr.mxu0 0.0
  %325 = vmatpush2.msra.mxu0 0.0
  %326 = vmatprep.subr.mxu0 0.0
  %327 = vmatpush2.msra.mxu0 0.0
  %328 = vmatprep.subr.mxu0 0.0
  %329 = vmatpush2.msra.mxu0 0.0
  %330 = vmatprep.mubr.f32.mxu0 0.0
  %331 = vmatmul.mubr.f32.gmra.mxu0 %v264
  %v332 = vpop.f32.mrf.mxu0
  %v333 = vadd.f32 %v260, %v332
  %v334 = vpop.f32.mrf.mxu0
  %335 = vdwg.mxu0
  %v336 = vmax.f32 %v333, 0.0
  %v337 = vld [vmem:[%s7] sm:$0xff]
  %v338 = vld [vmem:[%s7 + $0x8] sm:$0xff]
  %v339 = vld [vmem:[%s7 + $0x10] sm:$0xff]
  %v340 = vld [vmem:[%s7 + $0x18] sm:$0xff]
  %v341 = vld [vmem:[#allocation2] sm:$0x1]
  %v343 = vlaneseq
  %v344 = vshrl.u32 %v343, 7
  %v345 = vsub.s32 0, %v344
  %v346 = vrot.slane %v341, %v345
  %vm348 = vcmask 261120
  %v350 = vsel %vm348, %v336, 0
  %352 = vmatprep.subr.mxu0 0.0
  %353 = vmatpush1.msra.mxu0 0.0
  %354 = vmatprep.subr.mxu0 0.0
  %355 = vmatpush1.msra.mxu0 0.0
  %356 = vmatprep.subr.mxu0 0.0
  %357 = vmatpush1.msra.mxu0 0.0
  %358 = vmatprep.subr.mxu0 0.0
  %359 = vmatpush1.msra.mxu0 0.0
  %360 = vmatprep.subr.mxu0 0.0
  %361 = vmatpush1.msra.mxu0 0.0
  %362 = vmatprep.subr.mxu0 0.0
  %363 = vmatpush1.msra.mxu0 0.0
  %364 = vmatprep.subr.mxu0 0.0
  %365 = vmatpush1.msra.mxu0 0.0
  %366 = vmatprep.subr.mxu0 0.0
  %367 = vmatpush1.msra.mxu0 0.0
  %368 = vmatprep.subr.mxu0 0.0
  %369 = vmatpush1.msra.mxu0 0.0
  %370 = vmatprep.subr.mxu0 0.0
  %371 = vmatpush1.msra.mxu0 0.0
  %372 = vmatprep.subr.mxu0 0.0
  %373 = vmatpush1.msra.mxu0 0.0
  %374 = vmatprep.subr.mxu0 0.0
  %375 = vmatpush1.msra.mxu0 0.0
  %376 = vmatprep.subr.mxu0 0.0
  %377 = vmatpush1.msra.mxu0 %v340
  %378 = vmatprep.subr.mxu0 0.0
  %379 = vmatpush1.msra.mxu0 %v339
  %380 = vmatprep.subr.mxu0 0.0
  %381 = vmatpush1.msra.mxu0 %v338
  %382 = vmatprep.subr.mxu0 0.0
  %383 = vmatpush1.msra.mxu0 %v337
  %384 = vmatprep.subr.mxu0 0.0
  %385 = vmatpush2.msra.mxu0 0.0
  %386 = vmatprep.subr.mxu0 0.0
  %387 = vmatpush2.msra.mxu0 0.0
  %388 = vmatprep.subr.mxu0 0.0
  %389 = vmatpush2.msra.mxu0 0.0
  %390 = vmatprep.subr.mxu0 0.0
  %391 = vmatpush2.msra.mxu0 0.0
  %392 = vmatprep.subr.mxu0 0.0
  %393 = vmatpush2.msra.mxu0 0.0
  %394 = vmatprep.subr.mxu0 0.0
  %395 = vmatpush2.msra.mxu0 0.0
  %396 = vmatprep.subr.mxu0 0.0
  %397 = vmatpush2.msra.mxu0 0.0
  %398 = vmatprep.subr.mxu0 0.0
  %399 = vmatpush2.msra.mxu0 0.0
  %400 = vmatprep.subr.mxu0 0.0
  %401 = vmatpush2.msra.mxu0 0.0
  %402 = vmatprep.subr.mxu0 0.0
  %403 = vmatpush2.msra.mxu0 0.0
  %404 = vmatprep.subr.mxu0 0.0
  %405 = vmatpush2.msra.mxu0 0.0
  %406 = vmatprep.subr.mxu0 0.0
  %407 = vmatpush2.msra.mxu0 0.0
  %408 = vmatprep.subr.mxu0 0.0
  %409 = vmatpush2.msra.mxu0 0.0
  %410 = vmatprep.subr.mxu0 0.0
  %411 = vmatpush2.msra.mxu0 0.0
  %412 = vmatprep.subr.mxu0 0.0
  %413 = vmatpush2.msra.mxu0 0.0
  %414 = vmatprep.subr.mxu0 0.0
  %415 = vmatpush2.msra.mxu0 0.0
  %416 = vmatprep.mubr.f32.mxu0 0.0
  %417 = vmatmul.mubr.f32.gmra.mxu0 %v350
  %v418 = vpop.f32.mrf.mxu0
  %v419 = vadd.f32 %v346, %v418
  %v420 = vpop.f32.mrf.mxu0
  %421 = vdwg.mxu0
  %vm422 = vcmask 7168
  %423 = vst.msk [vmem:[%s9] sm:$0xff] %vm422, %v419
  // Predicated region
  $region38: #{tpu_custom_call.1} parent=0 // pred_check
    _
  $region39: #{tpu_custom_call.1} parent=0 // pred_check_branch
    %425 = sbr.rel (0) target = $region41
  $region40: #{tpu_custom_call.1} parent=0 // pred_region
    _
  $region41: #{tpu_custom_call.1} parent=0 // pred_fallthru
    _
  // Predicated region
  $region42: #{tpu_custom_call.1} parent=0 // pred_check
    _
  $region43: #{tpu_custom_call.1} parent=0 // pred_check_branch
    %427 = sbr.rel (0) target = $region45
  $region44: #{tpu_custom_call.1} parent=0 // pred_region
    _
  $region45: #{tpu_custom_call.1} parent=0 // pred_fallthru
    _

</llo_original>
